<compile_context>
chip_gen: v7x
topology: tpu7x:2x2x1
jax: 0.10.0
libtpu: 0.0.40
codegen_flags: <defaults>
</compile_context>

<pallas_src>
import functools

import numpy as np
import jax
import jax.numpy as jnp
from jax import lax
from jax.experimental import pallas as pl
from jax.experimental.pallas import tpu as pltpu


# ----------------------------------------------------------------------------
# Fused kernel: prototypes + cosine logits + cross-entropy + accuracy
# ----------------------------------------------------------------------------
def _cf_loss_kernel(meta_ref, fp_pad_ref, feats_ref, tgt_ref, out_ref, *,
                    num_instances, n_classes_pad, w):
    n_former = meta_ref[0]          # runtime scalar: #former prototypes
    n_valid = meta_ref[1]           # runtime scalar: #valid classes (former+novel)

    x = feats_ref[...].astype(jnp.float32)          # (batch, d)
    fp = fp_pad_ref[...].astype(jnp.float32)        # (n_classes_pad, d), zero-padded
    tgt = tgt_ref[...]                               # (batch, 1) int32

    batch = x.shape[0]
    inv_ni = 1.0 / float(num_instances)

    # ---- shared one-hot built once from the single targets buffer ----------
    cls = lax.broadcasted_iota(jnp.int32, (batch, n_classes_pad), 1)  # (batch, C)
    onehot = cls == tgt                                               # bool

    # ---- novel prototype means: sum_{b: tgt[b]==c, c novel} x[b] / n_inst ---
    is_novel = tgt >= n_former                                        # (batch, 1)
    sel01 = (onehot & is_novel).astype(jnp.bfloat16)                  # exact 0/1
    novel_sum = lax.dot_general(
        sel01, x.astype(jnp.bfloat16), (((0,), (0,)), ((), ())),
        preferred_element_type=jnp.float32)                           # (C, d)
    all_proto = fp + novel_sum * jnp.float32(inv_ni)                  # (C, d)

    # ---- logits = -(1 - cos(normalize(x), normalize(proto))) = cos - 1 -----
    xn = x * lax.rsqrt(jnp.maximum(jnp.sum(x * x, axis=1, keepdims=True), 1e-24))
    pn = all_proto * lax.rsqrt(
        jnp.maximum(jnp.sum(all_proto * all_proto, axis=1, keepdims=True), 1e-24))
    cos = lax.dot_general(
        xn.astype(jnp.bfloat16), pn.astype(jnp.bfloat16),
        (((1,), (1,)), ((), ())),
        preferred_element_type=jnp.float32)                           # (batch, C)

    valid = cls < n_valid
    logits = jnp.where(valid, cos - 1.0, jnp.float32(-1e30))

    # ---- CrossEntropyLoss (mean over batch, integer targets) ---------------
    row_max = jnp.max(logits, axis=1, keepdims=True)
    z = logits - row_max
    lse = jnp.log(jnp.sum(jnp.exp(z), axis=1, keepdims=True))
    tgt_z = jnp.sum(jnp.where(onehot, z, 0.0), axis=1, keepdims=True)
    ce = lse - tgt_z                                                  # (batch, 1)
    loss = (jnp.sum(ce) / jnp.float32(batch)) * jnp.float32(w)

    # ---- accuracy: first-index argmax == target (int32 path) ---------------
    idx = jnp.where(logits >= row_max, cls, n_classes_pad)            # int32
    argmax = jnp.min(idx, axis=1, keepdims=True)                      # (batch, 1)
    hits = (argmax == tgt).astype(jnp.float32)
    acc = jnp.sum(hits) / jnp.float32(batch)

    # ---- tiny SMEM scalar writeback -----------------------------------------
    out_ref[0] = loss
    out_ref[1] = acc


# ----------------------------------------------------------------------------
# Module forward (host-side incremental index assignment + one pallas_call)
# ----------------------------------------------------------------------------
def cosine_incremental_metric_cf_loss(former_proto, former_pt_labels, feats, labels,
                                      *, w=1.0, num_instances=5, n_classes_pad=128):
    feats = jnp.asarray(feats, jnp.float32)
    former_proto_np = np.asarray(former_proto, np.float32)
    batch, d = feats.shape
    n_ways = batch // num_instances
    assert n_ways * num_instances == batch, "batch must be n_ways * num_instances"

    # Host-side (matches the reference's .cpu().numpy().tolist() / .item() loop).
    former_list = [int(v) for v in np.asarray(former_pt_labels).reshape(-1).tolist()]
    n_former = len(former_list)
    class_labels = np.asarray(labels).reshape(n_ways, num_instances)[:, 0]
    group_targets = []
    n_novel = 0
    for cl in class_labels:
        cl = int(cl)
        if cl in former_list:
            group_targets.append(former_list.index(cl))
        else:
            group_targets.append(n_former + n_novel)
            n_novel += 1
    n_valid = n_former + n_novel
    assert n_valid <= n_classes_pad, "increase n_classes_pad"
    targets = np.repeat(np.asarray(group_targets, np.int32), num_instances)  # (batch,)

    # Zero-padded former prototypes: rows [0, n_former) = former_proto.
    fp_padded = np.zeros((n_classes_pad, d), np.float32)
    fp_padded[:n_former] = former_proto_np

    tgt_col = jnp.asarray(targets.reshape(batch, 1))                # (batch, 1) int32
    meta = jnp.asarray([n_former, n_valid], dtype=jnp.int32)        # SMEM scalars

    kern = functools.partial(_cf_loss_kernel,
                             num_instances=num_instances,
                             n_classes_pad=n_classes_pad,
                             w=float(w))
    out = pl.pallas_call(
        kern,
        out_shape=jax.ShapeDtypeStruct((2,), jnp.float32),
        in_specs=[
            pl.BlockSpec(memory_space=pltpu.MemorySpace.SMEM),   # meta scalars
            pl.BlockSpec(memory_space=pltpu.MemorySpace.VMEM),   # padded former proto
            pl.BlockSpec(memory_space=pltpu.MemorySpace.VMEM),   # feats
            pl.BlockSpec(memory_space=pltpu.MemorySpace.VMEM),   # targets
        ],
        out_specs=pl.BlockSpec(memory_space=pltpu.MemorySpace.SMEM),
        compiler_params=pltpu.CompilerParams(vmem_limit_bytes=32 * 1024 * 1024),
    )(meta, jnp.asarray(fp_padded), feats, tgt_col)

    return out[0], out[1]          # (loss * w, acc)


# ----------------------------------------------------------------------------
# Pure numpy reference (for a sanity check only)
# ----------------------------------------------------------------------------
def _reference(former_proto, former_pt_labels, feats, labels, *, w=1.0, num_instances=5):
    feats = np.asarray(feats, np.float64)
    fp = np.asarray(former_proto, np.float64)
    batch, d = feats.shape
    n_ways = batch // num_instances
    former_list = [int(v) for v in np.asarray(former_pt_labels).reshape(-1).tolist()]
    class_labels = np.asarray(labels).reshape(n_ways, num_instances)[:, 0]
    tgts, novel = [], []
    feats_g = feats.reshape(n_ways, num_instances, d)
    for i, cl in enumerate(class_labels):
        cl = int(cl)
        if cl in former_list:
            tgts.append(former_list.index(cl))
        else:
            tgts.append(len(former_list) + len(novel))
            novel.append(feats_g[i].mean(axis=0))      # raw-feature mean (as in reference)
    all_proto = np.concatenate([fp, np.stack(novel)], axis=0)
    tgt = np.repeat(np.asarray(tgts), num_instances)
    xn = feats / np.maximum(np.linalg.norm(feats, axis=1, keepdims=True), 1e-12)
    pn = all_proto / np.maximum(np.linalg.norm(all_proto, axis=1, keepdims=True), 1e-12)
    logits = xn @ pn.T - 1.0
    z = logits - logits.max(axis=1, keepdims=True)
    lse = np.log(np.exp(z).sum(axis=1))
    ce = (lse - z[np.arange(batch), tgt]).mean()
    acc = (logits.argmax(axis=1) == tgt).mean()
    return ce * w, acc


if __name__ == "__main__":
    num_instances = 5
    n_ways = 4
    batch = n_ways * num_instances          # 20
    embed_dim = 32
    w = 1.0

    key = jax.random.PRNGKey(0)
    k1, k2 = jax.random.split(key)
    feats = jax.random.normal(k1, (batch, embed_dim), jnp.float32)

    former_pt_labels = np.array([7, 3, 9], dtype=np.int32)       # 3 former classes
    former_proto = jax.random.normal(k2, (former_pt_labels.shape[0], embed_dim),
                                     jnp.float32)
    class_labels = np.array([3, 11, 7, 25], dtype=np.int32)      # 2 former, 2 novel groups
    labels = np.repeat(class_labels, num_instances)              # (20,)

    loss, acc = cosine_incremental_metric_cf_loss(
        former_proto, former_pt_labels, feats, labels,
        w=w, num_instances=num_instances)
    jax.block_until_ready((loss, acc))

    ref_loss, ref_acc = _reference(np.asarray(former_proto), former_pt_labels,
                                   np.asarray(feats), labels,
                                   w=w, num_instances=num_instances)
    ok = (np.isfinite(float(loss))
          and abs(float(loss) - ref_loss) < 5e-2
          and abs(float(acc) - ref_acc) < 0.2)
    if not ok:
        raise SystemExit(
            f"MISMATCH kernel=({float(loss):.6f},{float(acc):.3f}) "
            f"ref=({ref_loss:.6f},{ref_acc:.3f})")
    print("KERNEL_OK")
</pallas_src>

<mosaic_0001>
module attributes {stable_mosaic.version = 11 : i64} {
  func.func @_cf_loss_kernel(%arg0: memref<2xi32, #tpu.memory_space<smem>>, %arg1: memref<128x32xf32, #tpu.memory_space<vmem>>, %arg2: memref<20x32xf32, #tpu.memory_space<vmem>>, %arg3: memref<20x1xi32, #tpu.memory_space<vmem>>, %arg4: memref<2xf32, #tpu.memory_space<smem>>) attributes {dimension_semantics = [], scalar_prefetch = 0 : i64, scratch_operands = 0 : i64, tpu.core_type = #tpu.core_type<tc>} {
    %c0 = arith.constant 0 : index
    %0 = memref.load %arg0[%c0] : memref<2xi32, #tpu.memory_space<smem>>
    %c1 = arith.constant 1 : index
    %1 = memref.load %arg0[%c1] : memref<2xi32, #tpu.memory_space<smem>>
    %c0_0 = arith.constant 0 : index
    %c0_1 = arith.constant 0 : index
    %2 = vector.load %arg2[%c0_0, %c0_1] : memref<20x32xf32, #tpu.memory_space<vmem>>, vector<20x32xf32>
    %c0_2 = arith.constant 0 : index
    %c0_3 = arith.constant 0 : index
    %3 = vector.load %arg1[%c0_2, %c0_3] : memref<128x32xf32, #tpu.memory_space<vmem>>, vector<128x32xf32>
    %c0_4 = arith.constant 0 : index
    %c0_5 = arith.constant 0 : index
    %4 = vector.load %arg3[%c0_4, %c0_5] : memref<20x1xi32, #tpu.memory_space<vmem>>, vector<20x1xi32>
    %5 = tpu.iota {dimensions = array<i32: 1>} : vector<20x128xi32>
    %6 = vector.broadcast %4 : vector<20x1xi32> to vector<20x128xi32>
    %7 = arith.cmpi eq, %5, %6 : vector<20x128xi32>
    %8 = vector.broadcast %0 : i32 to vector<20x1xi32>
    %9 = arith.cmpi sge, %4, %8 : vector<20x1xi32>
    %10 = vector.broadcast %9 : vector<20x1xi1> to vector<20x128xi1>
    %11 = arith.andi %7, %10 : vector<20x128xi1>
    %12 = arith.extui %11 : vector<20x128xi1> to vector<20x128xi32>
    %13 = arith.sitofp %12 : vector<20x128xi32> to vector<20x128xf32>
    %14 = arith.truncf %13 : vector<20x128xf32> to vector<20x128xbf16>
    %15 = arith.truncf %2 : vector<20x32xf32> to vector<20x32xbf16>
    %cst = arith.constant dense<0.000000e+00> : vector<128x32xf32>
    %16 = tpu.matmul %14, %15, %cst {dimension_numbers = #tpu.dot_dimension_numbers<[0], [0], [1], [1], [0, 1, 1, 1], [], []>} : vector<20x128xbf16>, vector<20x32xbf16>, vector<128x32xf32> -> vector<128x32xf32>
    %cst_6 = arith.constant 2.000000e-01 : f32
    %17 = vector.broadcast %cst_6 : f32 to vector<128x32xf32>
    %18 = arith.mulf %16, %17 : vector<128x32xf32>
    %19 = arith.addf %3, %18 : vector<128x32xf32>
    %20 = arith.mulf %2, %2 : vector<20x32xf32>
    %cst_7 = arith.constant dense<0.000000e+00> : vector<20xf32>
    %21 = vector.multi_reduction <add>, %20, %cst_7 [1] : vector<20x32xf32> to vector<20xf32>
    %22 = vector.shape_cast %21 : vector<20xf32> to vector<20x1xf32>
    %cst_8 = arith.constant 1.000000e-24 : f32
    %23 = vector.broadcast %cst_8 : f32 to vector<20x1xf32>
    %24 = arith.maximumf %22, %23 : vector<20x1xf32>
    %25 = math.rsqrt %24 : vector<20x1xf32>
    %26 = vector.broadcast %25 : vector<20x1xf32> to vector<20x32xf32>
    %27 = arith.mulf %2, %26 : vector<20x32xf32>
    %28 = arith.mulf %19, %19 : vector<128x32xf32>
    %cst_9 = arith.constant dense<0.000000e+00> : vector<128xf32>
    %29 = vector.multi_reduction <add>, %28, %cst_9 [1] : vector<128x32xf32> to vector<128xf32>
    %30 = vector.shape_cast %29 : vector<128xf32> to vector<128x1xf32>
    %cst_10 = arith.constant 1.000000e-24 : f32
    %31 = vector.broadcast %cst_10 : f32 to vector<128x1xf32>
    %32 = arith.maximumf %30, %31 : vector<128x1xf32>
    %33 = math.rsqrt %32 : vector<128x1xf32>
    %34 = vector.broadcast %33 : vector<128x1xf32> to vector<128x32xf32>
    %35 = arith.mulf %19, %34 : vector<128x32xf32>
    %36 = arith.truncf %27 : vector<20x32xf32> to vector<20x32xbf16>
    %37 = arith.truncf %35 : vector<128x32xf32> to vector<128x32xbf16>
    %cst_11 = arith.constant dense<0.000000e+00> : vector<20x128xf32>
    %38 = tpu.matmul %36, %37, %cst_11 {dimension_numbers = #tpu.dot_dimension_numbers<[1], [1], [0], [0], [0, 0, 1, 0], [], []>} : vector<20x32xbf16>, vector<128x32xbf16>, vector<20x128xf32> -> vector<20x128xf32>
    %39 = vector.broadcast %1 : i32 to vector<20x128xi32>
    %40 = arith.cmpi slt, %5, %39 : vector<20x128xi32>
    %cst_12 = arith.constant 1.000000e+00 : f32
    %41 = vector.broadcast %cst_12 : f32 to vector<20x128xf32>
    %42 = arith.subf %38, %41 : vector<20x128xf32>
    %cst_13 = arith.constant -1.000000e+30 : f32
    %43 = vector.broadcast %cst_13 : f32 to vector<20x128xf32>
    %44 = arith.select %40, %42, %43 : vector<20x128xi1>, vector<20x128xf32>
    %cst_14 = arith.constant dense<0xFF800000> : vector<20xf32>
    %45 = vector.multi_reduction <maximumf>, %44, %cst_14 [1] : vector<20x128xf32> to vector<20xf32>
    %46 = vector.shape_cast %45 : vector<20xf32> to vector<20x1xf32>
    %47 = vector.broadcast %46 : vector<20x1xf32> to vector<20x128xf32>
    %48 = arith.subf %44, %47 : vector<20x128xf32>
    %49 = math.exp %48 : vector<20x128xf32>
    %cst_15 = arith.constant dense<0.000000e+00> : vector<20xf32>
    %50 = vector.multi_reduction <add>, %49, %cst_15 [1] : vector<20x128xf32> to vector<20xf32>
    %51 = vector.shape_cast %50 : vector<20xf32> to vector<20x1xf32>
    %52 = math.log %51 : vector<20x1xf32>
    %cst_16 = arith.constant 0.000000e+00 : f32
    %53 = vector.broadcast %cst_16 : f32 to vector<20x128xf32>
    %54 = arith.select %7, %48, %53 : vector<20x128xi1>, vector<20x128xf32>
    %cst_17 = arith.constant dense<0.000000e+00> : vector<20xf32>
    %55 = vector.multi_reduction <add>, %54, %cst_17 [1] : vector<20x128xf32> to vector<20xf32>
    %56 = vector.shape_cast %55 : vector<20xf32> to vector<20x1xf32>
    %57 = arith.subf %52, %56 : vector<20x1xf32>
    %58 = vector.shape_cast %57 : vector<20x1xf32> to vector<1x20x1xf32>
    %cst_18 = arith.constant dense<0.000000e+00> : vector<1xf32>
    %59 = vector.multi_reduction <add>, %58, %cst_18 [1, 2] : vector<1x20x1xf32> to vector<1xf32>
    %60 = vector.shape_cast %59 : vector<1xf32> to vector<1x1x1xf32>
    %61 = vector.extract %60[0, 0, 0] : f32 from vector<1x1x1xf32>
    %cst_19 = arith.constant 2.000000e+01 : f32
    %62 = arith.divf %61, %cst_19 : f32
    %cst_20 = arith.constant 1.000000e+00 : f32
    %63 = arith.mulf %62, %cst_20 : f32
    %64 = vector.broadcast %46 : vector<20x1xf32> to vector<20x128xf32>
    %65 = arith.cmpf oge, %44, %64 : vector<20x128xf32>
    %c128_i32 = arith.constant 128 : i32
    %66 = vector.broadcast %c128_i32 : i32 to vector<20x128xi32>
    %67 = arith.select %65, %5, %66 : vector<20x128xi1>, vector<20x128xi32>
    %cst_21 = arith.constant dense<2147483647> : vector<20xi32>
    %68 = vector.multi_reduction <minsi>, %67, %cst_21 [1] : vector<20x128xi32> to vector<20xi32>
    %69 = vector.shape_cast %68 : vector<20xi32> to vector<20x1xi32>
    %70 = arith.cmpi eq, %69, %4 : vector<20x1xi32>
    %71 = arith.extui %70 : vector<20x1xi1> to vector<20x1xi32>
    %72 = arith.sitofp %71 : vector<20x1xi32> to vector<20x1xf32>
    %73 = vector.shape_cast %72 : vector<20x1xf32> to vector<1x20x1xf32>
    %cst_22 = arith.constant dense<0.000000e+00> : vector<1xf32>
    %74 = vector.multi_reduction <add>, %73, %cst_22 [1, 2] : vector<1x20x1xf32> to vector<1xf32>
    %75 = vector.shape_cast %74 : vector<1xf32> to vector<1x1x1xf32>
    %76 = vector.extract %75[0, 0, 0] : f32 from vector<1x1x1xf32>
    %cst_23 = arith.constant 2.000000e+01 : f32
    %77 = arith.divf %76, %cst_23 : f32
    %c0_24 = arith.constant 0 : index
    %78 = memref.load %arg4[%c0_24] : memref<2xf32, #tpu.memory_space<smem>>
    memref.store %63, %arg4[%c0_24] : memref<2xf32, #tpu.memory_space<smem>>
    %c1_25 = arith.constant 1 : index
    %79 = memref.load %arg4[%c1_25] : memref<2xf32, #tpu.memory_space<smem>>
    memref.store %77, %arg4[%c1_25] : memref<2xf32, #tpu.memory_space<smem>>
    return
  }
}

</mosaic_0001>

<llo_original>
// kernel: tpu_custom_call.1
$region0: #{tpu_custom_call.1}
  #allocation0 [shape = 'u32[]', space=smem, size = 0x4, offset = 0x4, fixed_abs, tag = 'smem constant byte address 0x4 - core index']
  #allocation1 [shape = 'u32[144,128]{1,0:T(1,128)}', space=vmem, size = 0x12000, scoped, tag = 'internal scratch']
  %s0 = inlined_call_operand.vmem [shape: s32[2], index: 0, kind: input, shape index: {}]
  %s1 = inlined_call_operand.vmem [shape: f32[128,32], index: 1, kind: input, shape index: {}]
  %s2 = inlined_call_operand.vmem [shape: f32[20,32], index: 2, kind: input, shape index: {}]
  %s3 = inlined_call_operand.vmem [shape: s32[20,1], index: 3, kind: input, shape index: {}]
  %s4 = inlined_call_operand.hbm [shape: f32[2], index: 4, kind: output, shape index: {}]
  %s5 = sld [smem:[#allocation0]]
  $region30: #{tpu_custom_call.1} parent=0
    _
  %s7 = ssub.s32 1, %s5
  %s8 = scalar_select 0, %s7, %s5
  $region1: #{tpu_custom_call.1} parent=0
    #allocation2 [shape = 'u8[512]{0}', space=smem, size = 0x200, scoped, tag = 'input window, operand 0, single buffered']
    #allocation3 [shape = 's32[1]{0}', space=sflag, size = 0x4, scoped, tag = 'scoped memory for tpu_custom_call.1']
    #allocation4 [shape = 's32[1]{0}', space=sflag, size = 0x4, scoped, tag = 'scoped memory for tpu_custom_call.1']
    #allocation5 [shape = 'u8[512]{0}', space=smem, size = 0x200, scoped, tag = 'output window, operand 0, single buffered']
    %9 = vsyncpa [#allocation4], 0
    %10 = vsyncpa [#allocation3], 0
    // Predicated region
    $region2: #{tpu_custom_call.1} parent=1 // pred_check
      _
    $region3: #{tpu_custom_call.1} parent=1 // pred_check_branch
      %12 = sbr.rel (0) target = $region5
    $region4: #{tpu_custom_call.1} parent=1 // pred_region
      %s14 = ssub.s32 16, 16
      %15 = vsyncadd [#allocation4], %s14
      %s17 = sshll.u32 %s0, 4
      %s18 = int_to_ptr.vmem [resolvable:$true] %s17
      %20 = dma.vmem_to_smem %s18, 16, [#allocation2], [#allocation4]
    $region5: #{tpu_custom_call.1} parent=1 // pred_fallthru
      _
    // Predicated region
    $region6: #{tpu_custom_call.1} parent=1 // pred_check
      _
    $region7: #{tpu_custom_call.1} parent=1 // pred_check_branch
      %22 = sbr.rel (0) target = $region9
    $region8: #{tpu_custom_call.1} parent=1 // pred_region
      _
    $region9: #{tpu_custom_call.1} parent=1 // pred_fallthru
      _
    // Predicated region
    $region10: #{tpu_custom_call.1} parent=1 // pred_check
      _
    $region11: #{tpu_custom_call.1} parent=1 // pred_check_branch
      %24 = sbr.rel (0) target = $region13
    $region12: #{tpu_custom_call.1} parent=1 // pred_region
      _
    $region13: #{tpu_custom_call.1} parent=1 // pred_fallthru
      _
    // Predicated region
    $region14: #{tpu_custom_call.1} parent=1 // pred_check
      _
    $region15: #{tpu_custom_call.1} parent=1 // pred_check_branch
      %26 = sbr.rel (0) target = $region17
    $region16: #{tpu_custom_call.1} parent=1 // pred_region
      _
    $region17: #{tpu_custom_call.1} parent=1 // pred_fallthru
      _
    // Predicated region
    $region18: #{tpu_custom_call.1} parent=1 // pred_check
      _
    $region19: #{tpu_custom_call.1} parent=1 // pred_check_branch
      %28 = sbr.rel (0) target = $region21
    $region20: #{tpu_custom_call.1} parent=1 // pred_region
      %29 = dma.done [#allocation4], 16
    $region21: #{tpu_custom_call.1} parent=1 // pred_fallthru
      _
    %30 = sfence
    %s32 = sld [smem:[#allocation2]]
    %s33 = sld [smem:[#allocation2 + $0x1]]
    %v34 = vld [vmem:[%s2] sm:$0xff]
    %v35 = vld [vmem:[%s2 + $0x8] sm:$0xff]
    %v36 = vld [vmem:[%s2 + $0x10] sm:$0xf]
    %v37 = vld [vmem:[%s1] sm:$0xff]
    %v38 = vld [vmem:[%s1 + $0x8] sm:$0xff]
    %v39 = vld [vmem:[%s1 + $0x10] sm:$0xff]
    %v40 = vld [vmem:[%s1 + $0x18] sm:$0xff]
    %v41 = vld [vmem:[%s1 + $0x20] sm:$0xff]
    %v42 = vld [vmem:[%s1 + $0x28] sm:$0xff]
    %v43 = vld [vmem:[%s1 + $0x30] sm:$0xff]
    %v44 = vld [vmem:[%s1 + $0x38] sm:$0xff]
    %v45 = vld [vmem:[%s1 + $0x40] sm:$0xff]
    %v46 = vld [vmem:[%s1 + $0x48] sm:$0xff]
    %v47 = vld [vmem:[%s1 + $0x50] sm:$0xff]
    %v48 = vld [vmem:[%s1 + $0x58] sm:$0xff]
    %v49 = vld [vmem:[%s1 + $0x60] sm:$0xff]
    %v50 = vld [vmem:[%s1 + $0x68] sm:$0xff]
    %v51 = vld [vmem:[%s1 + $0x70] sm:$0xff]
    %v52 = vld [vmem:[%s1 + $0x78] sm:$0xff]
    %v53 = vld [vmem:[%s3] sm:$0xff]
    %v54 = vld [vmem:[%s3 + $0x8] sm:$0xff]
    %v55 = vld [vmem:[%s3 + $0x10] sm:$0xf]
    %v56 = vlaneseq
    %v57 = vand.u32 %v56, 127
    %58 = vset.pattern.permute.xlu0 0
    %59 = vperm.xlu0 %58, %v53
    %v60 = vpop.permute.xlu0 %59
    %61 = vset.pattern.permute.xlu0 0
    %62 = vperm.xlu0 %61, %v54
    %v63 = vpop.permute.xlu0 %62
    %64 = vset.pattern.permute.xlu0 0
    %65 = vperm.xlu0 %64, %v55
    %v66 = vpop.permute.xlu0 %65
    %vm67 = vcmp.eq.s32.totalorder %v57, %v60
    %vm68 = vcmp.eq.s32.totalorder %v57, %v63
    %vm69 = vcmp.eq.s32.totalorder %v57, %v66
    %v70 = vstv %s32
    %vm71 = vcmp.ge.s32.totalorder %v53, %v70
    %vm72 = vcmp.ge.s32.totalorder %v54, %v70
    %vm73 = vcmp.ge.s32.totalorder %v55, %v70
    %v74 = vsel %vm71, 1, 0
    %v75 = vsel %vm72, 1, 0
    %v76 = vsel %vm73, 1, 0
    %77 = vset.pattern.permute.xlu0 0
    %78 = vperm.xlu0 %77, %v74
    %v79 = vpop.permute.xlu0 %78
    %80 = vset.pattern.permute.xlu0 0
    %81 = vperm.xlu0 %80, %v75
    %v82 = vpop.permute.xlu0 %81
    %83 = vset.pattern.permute.xlu0 0
    %84 = vperm.xlu0 %83, %v76
    %v85 = vpop.permute.xlu0 %84
    %vm86 = vcmp.eq.s32.totalorder %v79, 1
    %vm87 = vcmp.eq.s32.totalorder %v82, 1
    %vm88 = vcmp.eq.s32.totalorder %v85, 1
    %vm89 = vmand %vm67, %vm86
    %vm90 = vmand %vm68, %vm87
    %vm91 = vmand %vm69, %vm88
    %v92 = vsel %vm89, 1, 0
    %v93 = vsel %vm90, 1, 0
    %v94 = vsel %vm91, 1, 0
    %v95 = vcvt.s32.f32 %v92
    %v96 = vcvt.s32.f32 %v93
    %v97 = vcvt.s32.f32 %v94
    %v98 = vpack.c.bf16 %v96, %v95
    %v99 = vpack.c.bf16 %v97, %v97
    %v100 = vpack.c.bf16 %v35, %v34
    %v101 = vpack.c.bf16 %v36, %v36
    %102 = vxpose.xlu0.c.b16.start [1/8] %v98, 128
    %103 = vxpose.xlu0.c.b16.cont [2/8] %v99, 128
    %104 = vxpose.xlu0.c.b16.cont [3/8] 0, 128
    %105 = vxpose.xlu0.c.b16.cont [4/8] 0, 128
    %106 = vxpose.xlu0.c.b16.cont [5/8] 0, 128
    %107 = vxpose.xlu0.c.b16.cont [6/8] 0, 128
    %108 = vxpose.xlu0.c.b16.cont [7/8] 0, 128
    %109 = vxpose.xlu0.c.b16.end [8/8] 0, 128
    %v110 = vpop.trf.xlu0
    %v111 = vpop.trf.xlu0
    %v112 = vpop.trf.xlu0
    %v113 = vpop.trf.xlu0
    %v114 = vpop.trf.xlu0
    %v115 = vpop.trf.xlu0
    %v116 = vpop.trf.xlu0
    %v117 = vpop.trf.xlu0
    %vm118 = vcmask 162816
    %v120 = vsel %vm118, %v110, 0
    %v123 = vsel %vm118, %v111, 0
    %v126 = vsel %vm118, %v112, 0
    %v129 = vsel %vm118, %v113, 0
    %v132 = vsel %vm118, %v114, 0
    %v135 = vsel %vm118, %v115, 0
    %v138 = vsel %vm118, %v116, 0
    %v141 = vsel %vm118, %v117, 0
    %vm143 = vcmask 1041408
    %v145 = vsel %vm143, %v101, 0
    %147 = vmatprep.subr.bf16.mxu0 0
    %148 = vmatpush1.bf16.msra.mxu0 %v100
    %149 = vmatprep.subr.bf16.mxu0 0
    %150 = vmatpush1.bf16.msra.mxu0 %v145
    %151 = vmatprep.subr.bf16.mxu0 0
    %152 = vmatpush1.bf16.msra.mxu0 0
    %153 = vmatprep.subr.bf16.mxu0 0
    %154 = vmatpush1.bf16.msra.mxu0 0
    %155 = vmatprep.subr.bf16.mxu0 0
    %156 = vmatpush1.bf16.msra.mxu0 0
    %157 = vmatprep.subr.bf16.mxu0 0
    %158 = vmatpush1.bf16.msra.mxu0 0
    %159 = vmatprep.subr.bf16.mxu0 0
    %160 = vmatpush1.bf16.msra.mxu0 0
    %161 = vmatprep.subr.bf16.mxu0 0
    %162 = vmatpush1.bf16.msra.mxu0 0
    %163 = vmatprep.subr.bf16.mxu0 0
    %164 = vmatpush1.bf16.msra.mxu0 0
    %165 = vmatprep.subr.bf16.mxu0 0
    %166 = vmatpush1.bf16.msra.mxu0 0
    %167 = vmatprep.subr.bf16.mxu0 0
    %168 = vmatpush1.bf16.msra.mxu0 0
    %169 = vmatprep.subr.bf16.mxu0 0
    %170 = vmatpush1.bf16.msra.mxu0 0
    %171 = vmatprep.subr.bf16.mxu0 0
    %172 = vmatpush1.bf16.msra.mxu0 0
    %173 = vmatprep.subr.bf16.mxu0 0
    %174 = vmatpush1.bf16.msra.mxu0 0
    %175 = vmatprep.subr.bf16.mxu0 0
    %176 = vmatpush1.bf16.msra.mxu0 0
    %177 = vmatprep.subr.bf16.mxu0 0
    %178 = vmatpush1.bf16.msra.mxu0 0
    %179 = vmatprep.mubr.bf16.mxu0 0
    %180 = vmatmul.mubr.bf16.gmra.mrb[0].mxu0 %v120
    %v181 = vpop.f32.mrb[0].mxu0
    %v182 = vadd.f32 0.0, %v181
    %v183 = vpop.f32.mrb[0].mxu0
    %v184 = vpop.f32.mrb[0].mxu0
    %v185 = vadd.f32 0.0, %v184
    %v186 = vpop.f32.mrb[0].mxu0
    %187 = vmatprep.mubr.bf16.mxu0 0
    %188 = vmatmul.mubr.bf16.gmra.mrb[0].mxu0 %v123
    %v189 = vpop.f32.mrb[0].mxu0
    %v190 = vadd.f32 0.0, %v189
    %v191 = vpop.f32.mrb[0].mxu0
    %v192 = vpop.f32.mrb[0].mxu0
    %v193 = vadd.f32 0.0, %v192
    %v194 = vpop.f32.mrb[0].mxu0
    %195 = vmatprep.mubr.bf16.mxu0 0
    %196 = vmatmul.mubr.bf16.gmra.mrb[0].mxu0 %v126
    %v197 = vpop.f32.mrb[0].mxu0
    %v198 = vadd.f32 0.0, %v197
    %v199 = vpop.f32.mrb[0].mxu0
    %v200 = vpop.f32.mrb[0].mxu0
    %v201 = vadd.f32 0.0, %v200
    %v202 = vpop.f32.mrb[0].mxu0
    %203 = vmatprep.mubr.bf16.mxu0 0
    %204 = vmatmul.mubr.bf16.gmra.mrb[0].mxu0 %v129
    %v205 = vpop.f32.mrb[0].mxu0
    %v206 = vadd.f32 0.0, %v205
    %v207 = vpop.f32.mrb[0].mxu0
    %v208 = vpop.f32.mrb[0].mxu0
    %v209 = vadd.f32 0.0, %v208
    %v210 = vpop.f32.mrb[0].mxu0
    %211 = vmatprep.mubr.bf16.mxu0 0
    %212 = vmatmul.mubr.bf16.gmra.mrb[0].mxu0 %v132
    %v213 = vpop.f32.mrb[0].mxu0
    %v214 = vadd.f32 0.0, %v213
    %v215 = vpop.f32.mrb[0].mxu0
    %v216 = vpop.f32.mrb[0].mxu0
    %v217 = vadd.f32 0.0, %v216
    %v218 = vpop.f32.mrb[0].mxu0
    %219 = vmatprep.mubr.bf16.mxu0 0
    %220 = vmatmul.mubr.bf16.gmra.mrb[0].mxu0 %v135
    %v221 = vpop.f32.mrb[0].mxu0
    %v222 = vadd.f32 0.0, %v221
    %v223 = vpop.f32.mrb[0].mxu0
    %v224 = vpop.f32.mrb[0].mxu0
    %v225 = vadd.f32 0.0, %v224
    %v226 = vpop.f32.mrb[0].mxu0
    %227 = vmatprep.mubr.bf16.mxu0 0
    %228 = vmatmul.mubr.bf16.gmra.mrb[0].mxu0 %v138
    %v229 = vpop.f32.mrb[0].mxu0
    %v230 = vadd.f32 0.0, %v229
    %v231 = vpop.f32.mrb[0].mxu0
    %v232 = vpop.f32.mrb[0].mxu0
    %v233 = vadd.f32 0.0, %v232
    %v234 = vpop.f32.mrb[0].mxu0
    %235 = vmatprep.mubr.bf16.mxu0 0
    %236 = vmatmul.mubr.bf16.gmra.mrb[0].mxu0 %v141
    %v237 = vpop.f32.mrb[0].mxu0
    %v238 = vadd.f32 0.0, %v237
    %v239 = vpop.f32.mrb[0].mxu0
    %v240 = vpop.f32.mrb[0].mxu0
    %v241 = vadd.f32 0.0, %v240
    %v242 = vpop.f32.mrb[0].mxu0
    %243 = vdwg.mxu0
    %v244 = vmul.f32 %v182, 0.2
    %v245 = vmul.f32 %v185, 0.2
    %v246 = vmul.f32 %v190, 0.2
    %v247 = vmul.f32 %v193, 0.2
    %v248 = vmul.f32 %v198, 0.2
    %v249 = vmul.f32 %v201, 0.2
    %v250 = vmul.f32 %v206, 0.2
    %v251 = vmul.f32 %v209, 0.2
    %v252 = vmul.f32 %v214, 0.2
    %v253 = vmul.f32 %v217, 0.2
    %v254 = vmul.f32 %v222, 0.2
    %v255 = vmul.f32 %v225, 0.2
    %v256 = vmul.f32 %v230, 0.2
    %v257 = vmul.f32 %v233, 0.2
    %v258 = vmul.f32 %v238, 0.2
    %v259 = vmul.f32 %v241, 0.2
    %v260 = vadd.f32 %v37, %v244
    %v261 = vadd.f32 %v38, %v245
    %v262 = vadd.f32 %v39, %v246
    %v263 = vadd.f32 %v40, %v247
    %v264 = vadd.f32 %v41, %v248
    %v265 = vadd.f32 %v42, %v249
    %v266 = vadd.f32 %v43, %v250
    %v267 = vadd.f32 %v44, %v251
    %v268 = vadd.f32 %v45, %v252
    %v269 = vadd.f32 %v46, %v253
    %v270 = vadd.f32 %v47, %v254
    %v271 = vadd.f32 %v48, %v255
    %v272 = vadd.f32 %v49, %v256
    %v273 = vadd.f32 %v50, %v257
    %v274 = vadd.f32 %v51, %v258
    %v275 = vadd.f32 %v52, %v259
    %v276 = vmul.f32 %v34, %v34
    %v277 = vmul.f32 %v35, %v35
    %v278 = vmul.f32 %v36, %v36
    %vm279 = vcmask 261120
    %v280 = vsel %vm279, %v276, 0.0
    %281 = vadd.xlane.f32.xlu0 %v280
    %v282 = vpop.xlane.xlu0 %281
    %v283 = vsel %vm279, %v277, 0.0
    %284 = vadd.xlane.f32.xlu0 %v283
    %v285 = vpop.xlane.xlu0 %284
    %vm286 = vcmask 257024
    %v287 = vsel %vm286, %v278, 0.0
    %288 = vadd.xlane.f32.xlu0 %v287
    %v289 = vpop.xlane.xlu0 %288
    %v290 = vmax.f32 %v282, 1e-24
    %v291 = vmax.f32 %v285, 1e-24
    %v292 = vmax.f32 %v289, 1e-24
    %v293 = vrsqrt.pop %v290
    %v294 = vrsqrt.pop %v291
    %v295 = vrsqrt.pop %v292
    %v296 = vmul.f32 %v34, %v293
    %v297 = vmul.f32 %v35, %v294
    %v298 = vmul.f32 %v36, %v295
    %v299 = vmul.f32 %v260, %v260
    %v300 = vmul.f32 %v261, %v261
    %v301 = vmul.f32 %v262, %v262
    %v302 = vmul.f32 %v263, %v263
    %v303 = vmul.f32 %v264, %v264
    %v304 = vmul.f32 %v265, %v265
    %v305 = vmul.f32 %v266, %v266
    %v306 = vmul.f32 %v267, %v267
    %v307 = vmul.f32 %v268, %v268
    %v308 = vmul.f32 %v269, %v269
    %v309 = vmul.f32 %v270, %v270
    %v310 = vmul.f32 %v271, %v271
    %v311 = vmul.f32 %v272, %v272
    %v312 = vmul.f32 %v273, %v273
    %v313 = vmul.f32 %v274, %v274
    %v314 = vmul.f32 %v275, %v275
    %v315 = vsel %vm279, %v299, 0.0
    %316 = vadd.xlane.f32.xlu0 %v315
    %v317 = vpop.xlane.xlu0 %316
    %v318 = vsel %vm279, %v300, 0.0
    %319 = vadd.xlane.f32.xlu0 %v318
    %v320 = vpop.xlane.xlu0 %319
    %v321 = vsel %vm279, %v301, 0.0
    %322 = vadd.xlane.f32.xlu0 %v321
    %v323 = vpop.xlane.xlu0 %322
    %v324 = vsel %vm279, %v302, 0.0
    %325 = vadd.xlane.f32.xlu0 %v324
    %v326 = vpop.xlane.xlu0 %325
    %v327 = vsel %vm279, %v303, 0.0
    %328 = vadd.xlane.f32.xlu0 %v327
    %v329 = vpop.xlane.xlu0 %328
    %v330 = vsel %vm279, %v304, 0.0
    %331 = vadd.xlane.f32.xlu0 %v330
    %v332 = vpop.xlane.xlu0 %331
    %v333 = vsel %vm279, %v305, 0.0
    %334 = vadd.xlane.f32.xlu0 %v333
    %v335 = vpop.xlane.xlu0 %334
    %v336 = vsel %vm279, %v306, 0.0
    %337 = vadd.xlane.f32.xlu0 %v336
    %v338 = vpop.xlane.xlu0 %337
    %v339 = vsel %vm279, %v307, 0.0
    %340 = vadd.xlane.f32.xlu0 %v339
    %v341 = vpop.xlane.xlu0 %340
    %v342 = vsel %vm279, %v308, 0.0
    %343 = vadd.xlane.f32.xlu0 %v342
    %v344 = vpop.xlane.xlu0 %343
    %v345 = vsel %vm279, %v309, 0.0
    %346 = vadd.xlane.f32.xlu0 %v345
    %v347 = vpop.xlane.xlu0 %346
    %v348 = vsel %vm279, %v310, 0.0
    %349 = vadd.xlane.f32.xlu0 %v348
    %v350 = vpop.xlane.xlu0 %349
    %v351 = vsel %vm279, %v311, 0.0
    %352 = vadd.xlane.f32.xlu0 %v351
    %v353 = vpop.xlane.xlu0 %352
    %v354 = vsel %vm279, %v312, 0.0
    %355 = vadd.xlane.f32.xlu0 %v354
    %v356 = vpop.xlane.xlu0 %355
    %v357 = vsel %vm279, %v313, 0.0
    %358 = vadd.xlane.f32.xlu0 %v357
    %v359 = vpop.xlane.xlu0 %358
    %v360 = vsel %vm279, %v314, 0.0
    %361 = vadd.xlane.f32.xlu0 %v360
    %v362 = vpop.xlane.xlu0 %361
    %v363 = vmax.f32 %v317, 1e-24
    %v364 = vmax.f32 %v320, 1e-24
    %v365 = vmax.f32 %v323, 1e-24
    %v366 = vmax.f32 %v326, 1e-24
    %v367 = vmax.f32 %v329, 1e-24
    %v368 = vmax.f32 %v332, 1e-24
    %v369 = vmax.f32 %v335, 1e-24
    %v370 = vmax.f32 %v338, 1e-24
    %v371 = vmax.f32 %v341, 1e-24
    %v372 = vmax.f32 %v344, 1e-24
    %v373 = vmax.f32 %v347, 1e-24
    %v374 = vmax.f32 %v350, 1e-24
    %v375 = vmax.f32 %v353, 1e-24
    %v376 = vmax.f32 %v356, 1e-24
    %v377 = vmax.f32 %v359, 1e-24
    %v378 = vmax.f32 %v362, 1e-24
    %v379 = vrsqrt.pop %v363
    %v380 = vrsqrt.pop %v364
    %v381 = vrsqrt.pop %v365
    %v382 = vrsqrt.pop %v366
    %v383 = vrsqrt.pop %v367
    %v384 = vrsqrt.pop %v368
    %v385 = vrsqrt.pop %v369
    %v386 = vrsqrt.pop %v370
    %v387 = vrsqrt.pop %v371
    %v388 = vrsqrt.pop %v372
    %v389 = vrsqrt.pop %v373
    %v390 = vrsqrt.pop %v374
    %v391 = vrsqrt.pop %v375
    %v392 = vrsqrt.pop %v376
    %v393 = vrsqrt.pop %v377
    %v394 = vrsqrt.pop %v378
    %v395 = vmul.f32 %v260, %v379
    %v396 = vmul.f32 %v261, %v380
    %v397 = vmul.f32 %v262, %v381
    %v398 = vmul.f32 %v263, %v382
    %v399 = vmul.f32 %v264, %v383
    %v400 = vmul.f32 %v265, %v384
    %v401 = vmul.f32 %v266, %v385
    %v402 = vmul.f32 %v267, %v386
    %v403 = vmul.f32 %v268, %v387
    %v404 = vmul.f32 %v269, %v388
    %v405 = vmul.f32 %v270, %v389
    %v406 = vmul.f32 %v271, %v390
    %v407 = vmul.f32 %v272, %v391
    %v408 = vmul.f32 %v273, %v392
    %v409 = vmul.f32 %v274, %v393
    %v410 = vmul.f32 %v275, %v394
    %v411 = vpack.c.bf16 %v297, %v296
    %v412 = vpack.c.bf16 %v298, %v298
    %v413 = vpack.c.bf16 %v396, %v395
    %v414 = vpack.c.bf16 %v398, %v397
    %v415 = vpack.c.bf16 %v400, %v399
    %v416 = vpack.c.bf16 %v402, %v401
    %v417 = vpack.c.bf16 %v404, %v403
    %v418 = vpack.c.bf16 %v406, %v405
    %v419 = vpack.c.bf16 %v408, %v407
    %v420 = vpack.c.bf16 %v410, %v409
    %v422 = vsel %vm279, %v411, 0
    %v425 = vsel %vm279, %v412, 0
    %v428 = vsel %vm279, %v413, 0
    %v431 = vsel %vm279, %v414, 0
    %v434 = vsel %vm279, %v415, 0
    %v437 = vsel %vm279, %v416, 0
    %v440 = vsel %vm279, %v417, 0
    %v443 = vsel %vm279, %v418, 0
    %v446 = vsel %vm279, %v419, 0
    %v449 = vsel %vm279, %v420, 0
    %451 = vmatprep.subr.bf16.mxu0 0
    %452 = vmatpush1.bf16.xpose.msra.mxu0 %v428
    %453 = vmatprep.subr.bf16.mxu0 0
    %454 = vmatpush1.bf16.xpose.msra.mxu0 %v431
    %455 = vmatprep.subr.bf16.mxu0 0
    %456 = vmatpush1.bf16.xpose.msra.mxu0 %v434
    %457 = vmatprep.subr.bf16.mxu0 0
    %458 = vmatpush1.bf16.xpose.msra.mxu0 %v437
    %459 = vmatprep.subr.bf16.mxu0 0
    %460 = vmatpush1.bf16.xpose.msra.mxu0 %v440
    %461 = vmatprep.subr.bf16.mxu0 0
    %462 = vmatpush1.bf16.xpose.msra.mxu0 %v443
    %463 = vmatprep.subr.bf16.mxu0 0
    %464 = vmatpush1.bf16.xpose.msra.mxu0 %v446
    %465 = vmatprep.subr.bf16.mxu0 0
    %466 = vmatpush1.bf16.xpose.msra.mxu0 %v449
    %467 = vmatprep.subr.bf16.mxu0 0
    %468 = vmatpush1.bf16.xpose.msra.mxu0 0
    %469 = vmatprep.subr.bf16.mxu0 0
    %470 = vmatpush1.bf16.xpose.msra.mxu0 0
    %471 = vmatprep.subr.bf16.mxu0 0
    %472 = vmatpush1.bf16.xpose.msra.mxu0 0
    %473 = vmatprep.subr.bf16.mxu0 0
    %474 = vmatpush1.bf16.xpose.msra.mxu0 0
    %475 = vmatprep.subr.bf16.mxu0 0
    %476 = vmatpush1.bf16.xpose.msra.mxu0 0
    %477 = vmatprep.subr.bf16.mxu0 0
    %478 = vmatpush1.bf16.xpose.msra.mxu0 0
    %479 = vmatprep.subr.bf16.mxu0 0
    %480 = vmatpush1.bf16.xpose.msra.mxu0 0
    %481 = vmatprep.subr.bf16.mxu0 0
    %482 = vmatpush1.bf16.xpose.msra.mxu0 0
    %483 = vmatprep.mubr.bf16.mxu0 0
    %484 = vmatmul.mubr.bf16.gmra.mrb[0].mxu0 %v422
    %v485 = vpop.f32.mrb[0].mxu0
    %v486 = vadd.f32 0.0, %v485
    %v487 = vpop.f32.mrb[0].mxu0
    %v488 = vpop.f32.mrb[0].mxu0
    %v489 = vadd.f32 0.0, %v488
    %v490 = vpop.f32.mrb[0].mxu0
    %491 = vmatprep.mubr.bf16.mxu0 0
    %492 = vmatmul.mubr.bf16.gmra.mrb[0].mxu0 %v425
    %v493 = vpop.f32.mrb[0].mxu0
    %v494 = vadd.f32 0.0, %v493
    %v495 = vpop.f32.mrb[0].mxu0
    %v496 = vpop.f32.mrb[0].mxu0
    %v497 = vpop.f32.mrb[0].mxu0
    %498 = vdwg.mxu0
    %v499 = vstv %s33
    %vm500 = vcmp.lt.s32.totalorder %v57, %v499
    %v501 = vsub.f32 %v486, 1.0
    %v502 = vsub.f32 %v489, 1.0
    %v503 = vsub.f32 %v494, 1.0
    %v504 = vsel %vm500, %v501, -1e+30
    %v505 = vsel %vm500, %v502, -1e+30
    %v506 = vsel %vm500, %v503, -1e+30
    %507 = vmax.xlane.f32.xlu0 %v504
    %v508 = vpop.xlane.xlu0 %507
    %509 = vmax.xlane.f32.xlu0 %v505
    %v510 = vpop.xlane.xlu0 %509
    %vm511 = vcmask 1043456
    %v512 = vsel %vm511, %v506, -inf
    %513 = vmax.xlane.f32.xlu0 %v512
    %v514 = vpop.xlane.xlu0 %513
    %v515 = vsub.f32 %v504, %v508
    %v516 = vsub.f32 %v505, %v510
    %v517 = vsub.f32 %v506, %v514
    %v518 = vmul.f32 %v515, 1.442695
    %v519 = vpow.pop %v518
    %v520 = vmul.f32 %v516, 1.442695
    %v521 = vpow.pop %v520
    %v522 = vmul.f32 %v517, 1.442695
    %v523 = vpow.pop %v522
    %524 = vadd.xlane.f32.xlu0 %v519
    %v525 = vpop.xlane.xlu0 %524
    %526 = vadd.xlane.f32.xlu0 %v521
    %v527 = vpop.xlane.xlu0 %526
    %v528 = vsel %vm511, %v523, 0.0
    %529 = vadd.xlane.f32.xlu0 %v528
    %v530 = vpop.xlane.xlu0 %529
    %v531 = vlog2.pop %v525
    %v532 = vmul.f32 %v531, 0.6931472
    %v533 = vlog2.pop %v527
    %v534 = vmul.f32 %v533, 0.6931472
    %v535 = vlog2.pop %v530
    %v536 = vmul.f32 %v535, 0.6931472
    %v537 = vsel %vm67, %v515, 0.0
    %v538 = vsel %vm68, %v516, 0.0
    %v539 = vsel %vm69, %v517, 0.0
    %540 = vadd.xlane.f32.xlu0 %v537
    %v541 = vpop.xlane.xlu0 %540
    %542 = vadd.xlane.f32.xlu0 %v538
    %v543 = vpop.xlane.xlu0 %542
    %v544 = vsel %vm511, %v539, 0.0
    %545 = vadd.xlane.f32.xlu0 %v544
    %v546 = vpop.xlane.xlu0 %545
    %v547 = vsub.f32 %v532, %v541
    %v548 = vsub.f32 %v534, %v543
    %v549 = vsub.f32 %v536, %v546
    %vm550 = vcmask 7168
    %v551 = vsel %vm550, %v547, 0.0
    %v552 = vsel %vm550, %v548, 0.0
    %v553 = vadd.f32 %v551, %v552
    %vm554 = vcmask 3072
    %v555 = vsel %vm554, %v549, 0.0
    %v556 = vadd.f32 %v553, %v555
    %557 = vadd.xlane.f32.xlu0 %v556
    %v558 = vpop.xlane.xlu0 %557
    %v559 = vrot.slane %v558, 4
    %v560 = vadd.f32 %v558, %v559
    %v561 = vrot.slane %v560, 2
    %v562 = vadd.f32 %v560, %v561
    %v563 = vrot.slane %v562, 1
    %v564 = vadd.f32 %v562, %v563
    %s565 = vtos %v564
    %v566 = vrcp.pop 20.0
    %s567 = vtos %v566
    %s568 = smul.f32 %s565, %s567
    %vm569 = vcmp.ge.f32.partialorder %v504, %v508
    %vm570 = vcmp.ge.f32.partialorder %v505, %v510
    %vm571 = vcmp.ge.f32.partialorder %v506, %v514
    %v572 = vsel %vm569, %v57, 128
    %v573 = vsel %vm570, %v57, 128
    %v574 = vsel %vm571, %v57, 128
    %v575 = vand.u32 %v572, 65535
    %v576 = vshra.s32 %v572, 16
    %v577 = vcvt.s32.f32 %v575
    %v578 = vcvt.s32.f32 %v576
    %579 = vmin.xlane.f32.xlu0 %v578
    %v580 = vpop.xlane.xlu0 %579
    %vm581 = vcmp.eq.f32.partialorder %v578, %v580
    %v582 = vsel %vm581, %v577, inf
    %583 = vmin.xlane.f32.xlu0 %v582
    %v584 = vpop.xlane.xlu0 %583
    %v585 = vcvt.f32.s32 %v584
    %v586 = vcvt.f32.s32 %v580
    %v587 = vshll.u32 %v586, 16
    %v588 = vadd.s32 %v587, %v585
    %v589 = vand.u32 %v573, 65535
    %v590 = vshra.s32 %v573, 16
    %v591 = vcvt.s32.f32 %v589
    %v592 = vcvt.s32.f32 %v590
    %593 = vmin.xlane.f32.xlu0 %v592
    %v594 = vpop.xlane.xlu0 %593
    %vm595 = vcmp.eq.f32.partialorder %v592, %v594
    %v596 = vsel %vm595, %v591, inf
    %597 = vmin.xlane.f32.xlu0 %v596
    %v598 = vpop.xlane.xlu0 %597
    %v599 = vcvt.f32.s32 %v598
    %v600 = vcvt.f32.s32 %v594
    %v601 = vshll.u32 %v600, 16
    %v602 = vadd.s32 %v601, %v599
    %v603 = vsel %vm511, %v574, 2147483647
    %v604 = vand.u32 %v603, 65535
    %v605 = vshra.s32 %v603, 16
    %v606 = vcvt.s32.f32 %v604
    %v607 = vcvt.s32.f32 %v605
    %608 = vmin.xlane.f32.xlu0 %v607
    %v609 = vpop.xlane.xlu0 %608
    %vm610 = vcmp.eq.f32.partialorder %v607, %v609
    %v611 = vsel %vm610, %v606, inf
    %612 = vmin.xlane.f32.xlu0 %v611
    %v613 = vpop.xlane.xlu0 %612
    %v614 = vcvt.f32.s32 %v613
    %v615 = vcvt.f32.s32 %v609
    %v616 = vshll.u32 %v615, 16
    %v617 = vadd.s32 %v616, %v614
    %vm618 = vcmp.eq.s32.totalorder %v588, %v53
    %vm619 = vcmp.eq.s32.totalorder %v602, %v54
    %vm620 = vcmp.eq.s32.totalorder %v617, %v55
    %v621 = vsel %vm618, 1, 0
    %v622 = vsel %vm619, 1, 0
    %v623 = vsel %vm620, 1, 0
    %v624 = vcvt.s32.f32 %v621
    %v625 = vcvt.s32.f32 %v622
    %v626 = vcvt.s32.f32 %v623
    %v627 = vsel %vm550, %v624, 0.0
    %v628 = vsel %vm550, %v625, 0.0
    %v629 = vadd.f32 %v627, %v628
    %v630 = vsel %vm554, %v626, 0.0
    %v631 = vadd.f32 %v629, %v630
    %632 = vadd.xlane.f32.xlu0 %v631
    %v633 = vpop.xlane.xlu0 %632
    %v634 = vrot.slane %v633, 4
    %v635 = vadd.f32 %v633, %v634
    %v636 = vrot.slane %v635, 2
    %v637 = vadd.f32 %v635, %v636
    %v638 = vrot.slane %v637, 1
    %v639 = vadd.f32 %v637, %v638
    %s640 = vtos %v639
    %v641 = vrcp.pop 20.0
    %s642 = vtos %v641
    %s643 = smul.f32 %s640, %s642
    %s644 = scalar_lea.smem [#allocation5], 0
    %645 = sst [smem:[%s644]] %s568
    %s646 = scalar_lea.smem [#allocation5], 1
    %647 = sst [smem:[%s646]] %s643
    // Predicated region
    $region22: #{tpu_custom_call.1} parent=1 // pred_check
      _
    $region23: #{tpu_custom_call.1} parent=1 // pred_check_branch
      %649 = sbr.rel (0) target = $region25
    $region24: #{tpu_custom_call.1} parent=1 // pred_region
      %s651 = ssub.s32 16, 16
      %652 = vsyncadd [#allocation3], %s651
      %655 = dma.smem_to_hbm [#allocation5], 16, %s4, [#allocation3]
    $region25: #{tpu_custom_call.1} parent=1 // pred_fallthru
      _
    // Predicated region
    $region26: #{tpu_custom_call.1} parent=1 // pred_check
      _
    $region27: #{tpu_custom_call.1} parent=1 // pred_check_branch
      %657 = sbr.rel (0) target = $region29
    $region28: #{tpu_custom_call.1} parent=1 // pred_region
      %658 = dma.done [#allocation3], 16
    $region29: #{tpu_custom_call.1} parent=1 // pred_fallthru
      _
    %659 = sfence
    %660 = vsyncpa [#allocation3], 1
    %661 = vsyncpa [#allocation4], 1

</llo_original>
